<compile_context>
chip_gen: v7x
topology: tpu7x:2x2x1
jax: 0.10.0
libtpu: 0.0.40
codegen_flags: <defaults>
</compile_context>

<pallas_src>
import math
import functools

import jax
import jax.numpy as jnp
from jax.experimental import pallas as pl
from jax.experimental.pallas import tpu as pltpu


def _cdiv(a, b):
    return -(-a // b)


def _round_up(n, m):
    return ((n + m - 1) // m) * m


# ---------------------------------------------------------------------------
# Pallas kernel: fused (matmul + scale + bias + clamp + activation)
# ---------------------------------------------------------------------------
def _lorentz_cls_kernel(x_ref, w_ref, bias_ref, o_ref, *, return_type):
    # x_ref:    (tm, D_eff)   streamed input tile (original dtype)
    # w_ref:    (D_eff, tk)   resident class-embedding matrix (time-sign folded)
    # bias_ref: (1, tk)       resident f32 bias with -2c folded in
    inner = jnp.dot(x_ref[...], w_ref[...],
                    preferred_element_type=jnp.float32)        # (tm, tk) f32
    dist = jnp.maximum(bias_ref[...] - 2.0 * inner, 0.0)        # clamp(min=0)

    if return_type == "neg_dist":
        out = -dist
    elif return_type == "prob":
        out = 10.0 / (1.0 + dist)
    elif return_type == "neg_log_prob":
        out = -10.0 * jnp.log(1.0 + dist)
    else:
        raise NotImplementedError(return_type)

    o_ref[...] = out.astype(o_ref.dtype)


# ---------------------------------------------------------------------------
# Plain-JAX glue (parameter folding / regrouping / optional expmap0)
# ---------------------------------------------------------------------------
def _expmap0(u_space, c):
    # TODO(synk): Lorentz expmap0 convention may differ between hyperbolic
    # libraries; this is the standard curvature-c hyperboloid map.
    sqrt_c = jnp.sqrt(jnp.float32(c))
    norm = jnp.linalg.norm(u_space, axis=-1, keepdims=True)
    norm = jnp.maximum(norm, 1e-8)
    time = jnp.cosh(sqrt_c * norm) / sqrt_c
    space = jnp.sinh(sqrt_c * norm) / (sqrt_c * norm) * u_space
    return jnp.concatenate([time, space], axis=-1)


def lorentz_cls_forward(x, cls_emb, bias, c,
                        x_manifold="hyp", return_type="neg_dist"):
    """Forward pass of LorentzCLS using a Pallas TPU kernel for the hot path."""
    if x_manifold != "hyp":
        x = _expmap0(x, c)

    lead_shape = x.shape[:-1]
    D = x.shape[-1]
    K = cls_emb.shape[0]

    # cinner(x, cls) = x @ cls_neg^T with cls time coordinate negated (exact).
    cls_f = cls_emb.astype(jnp.float32)
    cls_neg = cls_f.at[:, 0].multiply(-1.0)
    w_small = cls_neg.T                                        # (D, K) f32
    bias_row = bias.reshape(-1).astype(jnp.float32) - 2.0 * jnp.float32(c)

    xf = x.reshape(-1, D)                                      # (M, D), no pad
    M = xf.shape[0]
    in_isz = xf.dtype.itemsize
    out_dtype = x.dtype
    out_isz = jnp.dtype(out_dtype).itemsize

    # ---- Lane-dense regrouping for small K: pack G rows so output lane dim
    #      G*K is a multiple of 128 (block-diagonal weight).
    G = 1
    if K < 128:
        g = 128 // math.gcd(K, 128)
        w_bd_bytes = (g * D) * (g * K) * in_isz
        if g > 1 and M >= g and M % g == 0 and w_bd_bytes <= (4 << 20):
            G = g

    if G > 1:
        xg = xf.reshape(M // G, G * D)
        eye = jnp.eye(G, dtype=w_small.dtype)
        w_eff = jnp.einsum("gh,dk->gdhk", eye, w_small).reshape(G * D, G * K)
        bias_eff = jnp.tile(bias_row, G).reshape(1, G * K)
    else:
        xg = xf
        w_eff = w_small
        bias_eff = bias_row.reshape(1, K)

    w_eff = w_eff.astype(xg.dtype)
    M_rows, D_eff = xg.shape
    K_eff = w_eff.shape[1]

    # ---- K tiling (bounds VMEM for large class counts). 512 is a mult of 128.
    tk = K_eff if K_eff <= 512 else 512

    # ---- M tiling: byte-budget the streamed tile (~6 MiB in+out per step),
    #      keep >=2 grid steps when possible so v7x's two TCs both get work.
    bytes_per_row = D_eff * in_isz + tk * out_isz
    budget = 6 << 20
    tm = max((budget // bytes_per_row) // 8 * 8, 8)
    if M_rows >= 16:
        tm = min(tm, _round_up(_cdiv(M_rows, 2), 8))
    tm = min(tm, _round_up(M_rows, 8))
    if M_rows < 8:
        tm = M_rows            # block dim == full array dim -> (8,128) rule ok

    grid = (_cdiv(M_rows, tm), _cdiv(K_eff, tk))

    # Explicit VMEM budget: double-buffered in/out/weight/bias + headroom.
    vmem_bytes = (2 * tm * D_eff * in_isz + 2 * tm * tk * out_isz
                  + 2 * D_eff * tk * in_isz + 2 * tk * 4 + (2 << 20))
    vmem_limit = int(min(max(vmem_bytes, 16 << 20), 64 << 20))

    flops = 2 * M_rows * D_eff * K_eff
    transcendentals = M * K if return_type in ("prob", "neg_log_prob") else 0
    bytes_accessed = (M_rows * D_eff * in_isz + M_rows * K_eff * out_isz
                      + D_eff * K_eff * in_isz + K_eff * 4)

    kernel = functools.partial(_lorentz_cls_kernel, return_type=return_type)

    out = pl.pallas_call(
        kernel,
        out_shape=jax.ShapeDtypeStruct((M_rows, K_eff), out_dtype),
        grid=grid,
        in_specs=[
            pl.BlockSpec((tm, D_eff), lambda i, j: (i, 0)),    # streamed x tile
            pl.BlockSpec((D_eff, tk), lambda i, j: (0, j)),    # resident weight
            pl.BlockSpec((1, tk), lambda i, j: (0, j)),        # resident bias
        ],
        out_specs=pl.BlockSpec((tm, tk), lambda i, j: (i, j)),
        compiler_params=pltpu.CompilerParams(
            dimension_semantics=("parallel", "parallel"),
            vmem_limit_bytes=vmem_limit),
        cost_estimate=pl.CostEstimate(
            flops=flops, transcendentals=transcendentals,
            bytes_accessed=bytes_accessed),
    )(xg, w_eff, bias_eff)

    if G > 1:
        out = out.reshape(M, K)
    return out.reshape(*lead_shape, K)


# ---------------------------------------------------------------------------
# Pure-JAX reference (mirrors the PyTorch forward) for verification
# ---------------------------------------------------------------------------
def lorentz_cls_reference(x, cls_emb, bias, c, return_type="neg_dist"):
    x_neg = x.at[..., 0:1].multiply(-1.0)
    inner = x_neg @ cls_emb.T
    dist = jnp.maximum(-2.0 * c - 2.0 * inner + bias, 0.0)
    if return_type == "neg_dist":
        return -dist
    if return_type == "prob":
        return 10.0 / (1.0 + dist)
    if return_type == "neg_log_prob":
        return -10.0 * jnp.log(1.0 + dist)
    raise NotImplementedError(return_type)


def _make_hyperboloid_points(key, shape_space, c):
    space = 0.1 * jax.random.normal(key, shape_space, dtype=jnp.float32)
    time = jnp.sqrt(1.0 / c + jnp.sum(space ** 2, axis=-1, keepdims=True))
    return jnp.concatenate([time, space], axis=-1)


if __name__ == "__main__":
    key = jax.random.PRNGKey(0)
    k_x, k_cls, k_b, k_x2 = jax.random.split(key, 4)

    # Small deterministic setup.
    c = 0.5                    # manifold curvature
    in_channels = 31           # -> D = in_channels + 1 = 32
    out_channels = 16          # K
    B, N = 2, 8
    D = in_channels + 1

    x = _make_hyperboloid_points(k_x, (B, N, in_channels), c)       # (B, N, D)

    # Class embeddings: deterministic stand-in for
    # manifold.random_normal((K, D), std=1/sqrt(D)) projected on the manifold.
    cls_space = (1.0 / math.sqrt(D)) * jax.random.normal(
        k_cls, (out_channels, in_channels), dtype=jnp.float32)
    cls_time = jnp.sqrt(1.0 / c + jnp.sum(cls_space ** 2, axis=-1, keepdims=True))
    cls_emb = jnp.concatenate([cls_time, cls_space], axis=-1)        # (K, D)

    bias = 0.05 * jax.random.normal(k_b, (out_channels,), dtype=jnp.float32)

    # Main path: M divisible by the regroup factor -> lane-dense grouped kernel.
    for rt in ("neg_dist", "prob", "neg_log_prob"):
        out = jax.block_until_ready(
            lorentz_cls_forward(x, cls_emb, bias, c,
                                x_manifold="hyp", return_type=rt))
        ref = lorentz_cls_reference(x, cls_emb, bias, c, return_type=rt)
        assert out.shape == (B, N, out_channels)
        assert jnp.allclose(out, ref, atol=1e-5, rtol=1e-5), f"mismatch ({rt})"

    # Ragged path: M=10 (not a multiple of 8, not groupable) exercises the
    # masked final block without any wrapper-side padding.
    x_ragged = _make_hyperboloid_points(k_x2, (10, in_channels), c)  # (10, D)
    out_r = jax.block_until_ready(
        lorentz_cls_forward(x_ragged, cls_emb, bias, c, return_type="neg_dist"))
    ref_r = lorentz_cls_reference(x_ragged, cls_emb, bias, c,
                                  return_type="neg_dist")
    assert out_r.shape == (10, out_channels)
    assert jnp.allclose(out_r, ref_r, atol=1e-5, rtol=1e-5), "mismatch (ragged)"

    print("KERNEL_OK")
</pallas_src>

<mosaic_0001>
module attributes {stable_mosaic.version = 11 : i64} {
  func.func @_lorentz_cls_kernel(%arg0: i32, %arg1: i32, %arg2: memref<2x256xf32, #tpu.memory_space<vmem>>, %arg3: memref<256x128xf32, #tpu.memory_space<vmem>>, %arg4: memref<1x128xf32, #tpu.memory_space<vmem>>, %arg5: memref<2x128xf32, #tpu.memory_space<vmem>>) attributes {dimension_semantics = [#tpu.dimension_semantics<parallel>, #tpu.dimension_semantics<parallel>], iteration_bounds = array<i64: 1, 1>, scalar_prefetch = 0 : i64, scratch_operands = 0 : i64, tpu.core_type = #tpu.core_type<tc>, window_params = [{transform_indices = @transform_0, window_bounds = array<i64: 2, 256>}, {transform_indices = @transform_1, window_bounds = array<i64: 256, 128>}, {transform_indices = @transform_2, window_bounds = array<i64: 1, 128>}, {transform_indices = @transform_3, window_bounds = array<i64: 2, 128>}]} {
    %c0 = arith.constant 0 : index
    %c0_0 = arith.constant 0 : index
    %0 = vector.load %arg2[%c0, %c0_0] : memref<2x256xf32, #tpu.memory_space<vmem>>, vector<2x256xf32>
    %c0_1 = arith.constant 0 : index
    %c0_2 = arith.constant 0 : index
    %1 = vector.load %arg3[%c0_1, %c0_2] : memref<256x128xf32, #tpu.memory_space<vmem>>, vector<256x128xf32>
    %cst = arith.constant dense<0.000000e+00> : vector<2x128xf32>
    %2 = tpu.matmul %0, %1, %cst {dimension_numbers = #tpu.dot_dimension_numbers<[1], [0], [0], [1], [0, 0, 1, 1], [], []>} : vector<2x256xf32>, vector<256x128xf32>, vector<2x128xf32> -> vector<2x128xf32>
    %c0_3 = arith.constant 0 : index
    %c0_4 = arith.constant 0 : index
    %3 = vector.load %arg4[%c0_3, %c0_4] : memref<1x128xf32, #tpu.memory_space<vmem>>, vector<1x128xf32>
    %cst_5 = arith.constant 2.000000e+00 : f32
    %4 = vector.broadcast %cst_5 : f32 to vector<2x128xf32>
    %5 = arith.mulf %4, %2 : vector<2x128xf32>
    %6 = vector.broadcast %3 : vector<1x128xf32> to vector<2x128xf32>
    %7 = arith.subf %6, %5 : vector<2x128xf32>
    %cst_6 = arith.constant 0.000000e+00 : f32
    %8 = vector.broadcast %cst_6 : f32 to vector<2x128xf32>
    %9 = arith.maximumf %7, %8 : vector<2x128xf32>
    %cst_7 = arith.constant 0.000000e+00 : f32
    %10 = vector.broadcast %cst_7 : f32 to vector<2x128xf32>
    %11 = arith.subf %10, %9 : vector<2x128xf32>
    %c0_8 = arith.constant 0 : index
    %c0_9 = arith.constant 0 : index
    %12 = vector.load %arg5[%c0_8, %c0_9] : memref<2x128xf32, #tpu.memory_space<vmem>>, vector<2x128xf32>
    tpu.vector_store %arg5[%c0_8, %c0_9], %11 {strides = array<i32>} : memref<2x128xf32, #tpu.memory_space<vmem>>, vector<2x128xf32>,
    return
  }
  func.func @transform_0(%arg0: i32, %arg1: i32) -> (i32, i32) {
    %c0_i32 = arith.constant 0 : i32
    %c0_i32_0 = arith.constant 0 : i32
    return %arg0, %c0_i32 : i32, i32
  }
  func.func @transform_1(%arg0: i32, %arg1: i32) -> (i32, i32) {
    %c0_i32 = arith.constant 0 : i32
    %c0_i32_0 = arith.constant 0 : i32
    return %c0_i32, %arg1 : i32, i32
  }
  func.func @transform_2(%arg0: i32, %arg1: i32) -> (i32, i32) {
    %c0_i32 = arith.constant 0 : i32
    %c0_i32_0 = arith.constant 0 : i32
    return %c0_i32, %arg1 : i32, i32
  }
  func.func @transform_3(%arg0: i32, %arg1: i32) -> (i32, i32) {
    %c0_i32 = arith.constant 0 : i32
    return %arg0, %arg1 : i32, i32
  }
}

</mosaic_0001>

<llo_original>
// kernel: tpu_custom_call.1
$region0: #{tpu_custom_call.1}
  #allocation0 [shape = 'u32[]', space=smem, size = 0x4, offset = 0x4, fixed_abs, tag = 'smem constant byte address 0x4 - core index']
  #allocation1 [shape = 'u32[144,128]{1,0:T(1,128)}', space=vmem, size = 0x12000, scoped, tag = 'internal scratch']
  %s0 = inlined_call_operand.hbm [shape: f32[2,256], index: 0, kind: input, shape index: {}]
  %s1 = inlined_call_operand.hbm [shape: f32[256,128], index: 1, kind: input, shape index: {}]
  %s2 = inlined_call_operand.vmem [shape: f32[1,128], index: 2, kind: input, shape index: {}]
  %s3 = inlined_call_operand.hbm [shape: f32[2,128], index: 3, kind: output, shape index: {}]
  %s4 = sld [smem:[#allocation0]]
  $region30: #{tpu_custom_call.1} parent=0
    _
  %s6 = ssub.s32 1, %s4
  %s7 = scalar_select 0, %s6, %s4
  $region1: #{tpu_custom_call.1} parent=0
    #allocation2 [shape = 'u8[2048]{0}', space=vmem, size = 0x800, scoped, tag = 'input window, operand 0, single buffered']
    #allocation3 [shape = 's32[1]{0}', space=sflag, size = 0x4, scoped, tag = 'scoped memory for tpu_custom_call.1']
    #allocation4 [shape = 's32[1]{0}', space=sflag, size = 0x4, scoped, tag = 'scoped memory for tpu_custom_call.1']
    #allocation5 [shape = 'u8[131072]{0}', space=vmem, size = 0x20000, scoped, tag = 'input window, operand 1, single buffered']
    #allocation6 [shape = 's32[1]{0}', space=sflag, size = 0x4, scoped, tag = 'scoped memory for tpu_custom_call.1']
    #allocation7 [shape = 'u8[1024]{0}', space=vmem, size = 0x400, scoped, tag = 'output window, operand 0, single buffered']
    %8 = vsyncpa [#allocation3], 0
    %9 = vsyncpa [#allocation6], 0
    %10 = vsyncpa [#allocation4], 0
    // Predicated region
    $region2: #{tpu_custom_call.1} parent=1 // pred_check
      _
    $region3: #{tpu_custom_call.1} parent=1 // pred_check_branch
      %12 = sbr.rel (0) target = $region5
    $region4: #{tpu_custom_call.1} parent=1 // pred_region
      %s14 = ssub.s32 64, 64
      %15 = vsyncadd [#allocation3], %s14
      %s17 = sshll.u32 [#allocation2], 4
      %s18 = int_to_ptr.vmem [resolvable:$true] %s17
      %20 = dma.hbm_to_vmem [thread:$0]  %s0, 64, %s18, [#allocation3]
    $region5: #{tpu_custom_call.1} parent=1 // pred_fallthru
      _
    // Predicated region
    $region6: #{tpu_custom_call.1} parent=1 // pred_check
      _
    $region7: #{tpu_custom_call.1} parent=1 // pred_check_branch
      %22 = sbr.rel (0) target = $region9
    $region8: #{tpu_custom_call.1} parent=1 // pred_region
      %s24 = ssub.s32 4096, 4096
      %25 = vsyncadd [#allocation6], %s24
      %s26 = sshll.u32 [#allocation5], 4
      %s27 = int_to_ptr.vmem [resolvable:$true] %s26
      %32 = dma.hbm_to_vmem [thread:$0]  %s1, 4096, %s27, [#allocation6], 128, 128, 8
    $region9: #{tpu_custom_call.1} parent=1 // pred_fallthru
      _
    // Predicated region
    $region10: #{tpu_custom_call.1} parent=1 // pred_check
      _
    $region11: #{tpu_custom_call.1} parent=1 // pred_check_branch
      %34 = sbr.rel (0) target = $region13
    $region12: #{tpu_custom_call.1} parent=1 // pred_region
      _
    $region13: #{tpu_custom_call.1} parent=1 // pred_fallthru
      _
    // Predicated region
    $region14: #{tpu_custom_call.1} parent=1 // pred_check
      _
    $region15: #{tpu_custom_call.1} parent=1 // pred_check_branch
      %36 = sbr.rel (0) target = $region17
    $region16: #{tpu_custom_call.1} parent=1 // pred_region
      %37 = dma.done [#allocation3], 64
    $region17: #{tpu_custom_call.1} parent=1 // pred_fallthru
      _
    // Predicated region
    $region18: #{tpu_custom_call.1} parent=1 // pred_check
      _
    $region19: #{tpu_custom_call.1} parent=1 // pred_check_branch
      %39 = sbr.rel (0) target = $region21
    $region20: #{tpu_custom_call.1} parent=1 // pred_region
      %40 = dma.done [#allocation6], 4096
    $region21: #{tpu_custom_call.1} parent=1 // pred_fallthru
      _
    %v41 = vld [vmem:[#allocation2] sm:$0xf]
    %v42 = vld [vmem:[#allocation5] sm:$0xff]
    %v43 = vld [vmem:[#allocation5 + $0x8] sm:$0xff]
    %v44 = vld [vmem:[#allocation5 + $0x10] sm:$0xff]
    %v45 = vld [vmem:[#allocation5 + $0x18] sm:$0xff]
    %v46 = vld [vmem:[#allocation5 + $0x20] sm:$0xff]
    %v47 = vld [vmem:[#allocation5 + $0x28] sm:$0xff]
    %v48 = vld [vmem:[#allocation5 + $0x30] sm:$0xff]
    %v49 = vld [vmem:[#allocation5 + $0x38] sm:$0xff]
    %v50 = vld [vmem:[#allocation5 + $0x40] sm:$0xff]
    %v51 = vld [vmem:[#allocation5 + $0x48] sm:$0xff]
    %v52 = vld [vmem:[#allocation5 + $0x50] sm:$0xff]
    %v53 = vld [vmem:[#allocation5 + $0x58] sm:$0xff]
    %v54 = vld [vmem:[#allocation5 + $0x60] sm:$0xff]
    %v55 = vld [vmem:[#allocation5 + $0x68] sm:$0xff]
    %v56 = vld [vmem:[#allocation5 + $0x70] sm:$0xff]
    %v57 = vld [vmem:[#allocation5 + $0x78] sm:$0xff]
    %v58 = vld [vmem:[#allocation5 + $0x80] sm:$0xff]
    %v59 = vld [vmem:[#allocation5 + $0x88] sm:$0xff]
    %v60 = vld [vmem:[#allocation5 + $0x90] sm:$0xff]
    %v61 = vld [vmem:[#allocation5 + $0x98] sm:$0xff]
    %v62 = vld [vmem:[#allocation5 + $0xa0] sm:$0xff]
    %v63 = vld [vmem:[#allocation5 + $0xa8] sm:$0xff]
    %v64 = vld [vmem:[#allocation5 + $0xb0] sm:$0xff]
    %v65 = vld [vmem:[#allocation5 + $0xb8] sm:$0xff]
    %v66 = vld [vmem:[#allocation5 + $0xc0] sm:$0xff]
    %v67 = vld [vmem:[#allocation5 + $0xc8] sm:$0xff]
    %v68 = vld [vmem:[#allocation5 + $0xd0] sm:$0xff]
    %v69 = vld [vmem:[#allocation5 + $0xd8] sm:$0xff]
    %v70 = vld [vmem:[#allocation5 + $0xe0] sm:$0xff]
    %v71 = vld [vmem:[#allocation5 + $0xe8] sm:$0xff]
    %v72 = vld [vmem:[#allocation5 + $0xf0] sm:$0xff]
    %v73 = vld [vmem:[#allocation5 + $0xf8] sm:$0xff]
    %v76 = vunpack.c.l.s4 1983009808
    %v77 = vunpack.c.0.s8 %v76
    %v78 = vlaneseq
    %v79 = vshrl.u32 %v78, 7
    %v80 = vsub.s32 %v77, %v79
    %v81 = vrot.slane %v41, %v80
    %v82 = vcombine.high %v81, %v81
    %85 = vmatprep.subr.mxu0 0.0
    %86 = vmatpush1.msra.mxu0 %v42
    %87 = vmatprep.subr.mxu0 0.0
    %88 = vmatpush1.msra.mxu0 %v43
    %89 = vmatprep.subr.mxu0 0.0
    %90 = vmatpush1.msra.mxu0 %v44
    %91 = vmatprep.subr.mxu0 0.0
    %92 = vmatpush1.msra.mxu0 %v45
    %93 = vmatprep.subr.mxu0 0.0
    %94 = vmatpush1.msra.mxu0 %v46
    %95 = vmatprep.subr.mxu0 0.0
    %96 = vmatpush1.msra.mxu0 %v47
    %97 = vmatprep.subr.mxu0 0.0
    %98 = vmatpush1.msra.mxu0 %v48
    %99 = vmatprep.subr.mxu0 0.0
    %100 = vmatpush1.msra.mxu0 %v49
    %101 = vmatprep.subr.mxu0 0.0
    %102 = vmatpush1.msra.mxu0 %v50
    %103 = vmatprep.subr.mxu0 0.0
    %104 = vmatpush1.msra.mxu0 %v51
    %105 = vmatprep.subr.mxu0 0.0
    %106 = vmatpush1.msra.mxu0 %v52
    %107 = vmatprep.subr.mxu0 0.0
    %108 = vmatpush1.msra.mxu0 %v53
    %109 = vmatprep.subr.mxu0 0.0
    %110 = vmatpush1.msra.mxu0 %v54
    %111 = vmatprep.subr.mxu0 0.0
    %112 = vmatpush1.msra.mxu0 %v55
    %113 = vmatprep.subr.mxu0 0.0
    %114 = vmatpush1.msra.mxu0 %v56
    %115 = vmatprep.subr.mxu0 0.0
    %116 = vmatpush1.msra.mxu0 %v57
    %117 = vmatprep.subr.mxu0 0.0
    %118 = vmatpush1.msra.mxu0 %v58
    %119 = vmatprep.subr.mxu0 0.0
    %120 = vmatpush1.msra.mxu0 %v59
    %121 = vmatprep.subr.mxu0 0.0
    %122 = vmatpush1.msra.mxu0 %v60
    %123 = vmatprep.subr.mxu0 0.0
    %124 = vmatpush1.msra.mxu0 %v61
    %125 = vmatprep.subr.mxu0 0.0
    %126 = vmatpush1.msra.mxu0 %v62
    %127 = vmatprep.subr.mxu0 0.0
    %128 = vmatpush1.msra.mxu0 %v63
    %129 = vmatprep.subr.mxu0 0.0
    %130 = vmatpush1.msra.mxu0 %v64
    %131 = vmatprep.subr.mxu0 0.0
    %132 = vmatpush1.msra.mxu0 %v65
    %133 = vmatprep.subr.mxu0 0.0
    %134 = vmatpush1.msra.mxu0 %v66
    %135 = vmatprep.subr.mxu0 0.0
    %136 = vmatpush1.msra.mxu0 %v67
    %137 = vmatprep.subr.mxu0 0.0
    %138 = vmatpush1.msra.mxu0 %v68
    %139 = vmatprep.subr.mxu0 0.0
    %140 = vmatpush1.msra.mxu0 %v69
    %141 = vmatprep.subr.mxu0 0.0
    %142 = vmatpush1.msra.mxu0 %v70
    %143 = vmatprep.subr.mxu0 0.0
    %144 = vmatpush1.msra.mxu0 %v71
    %145 = vmatprep.subr.mxu0 0.0
    %146 = vmatpush1.msra.mxu0 %v72
    %147 = vmatprep.subr.mxu0 0.0
    %148 = vmatpush1.msra.mxu0 %v73
    %149 = vmatprep.mubr.f32.mxu0 %v82
    %150 = vmatmul.mubr.f32.gmra.mrb[0].mxu0 %v81
    %v151 = vpop.f32.mrb[0].mxu0
    %v152 = vadd.f32 0.0, %v151
    %v153 = vpop.f32.mrb[0].mxu0
    %154 = vdwg.mxu0
    %v155 = vld [vmem:[%s2] sm:$0x1]
    %v156 = vmul.f32 %v152, 2.0
    %v158 = vlaneseq
    %v159 = vshrl.u32 %v158, 7
    %v160 = vsub.s32 0, %v159
    %v161 = vrot.slane %v155, %v160
    %v163 = vsub.f32 %v161, %v156
    %v164 = vmax.f32 %v163, 0.0
    %v165 = vsub.f32 0.0, %v164
    %166 = vst [vmem:[#allocation7] sm:$0x3] %v165
    // Predicated region
    $region22: #{tpu_custom_call.1} parent=1 // pred_check
      _
    $region23: #{tpu_custom_call.1} parent=1 // pred_check_branch
      %168 = sbr.rel (0) target = $region25
    $region24: #{tpu_custom_call.1} parent=1 // pred_region
      %s170 = ssub.s32 32, 32
      %171 = vsyncadd [#allocation4], %s170
      %s173 = sshll.u32 [#allocation7], 4
      %s174 = int_to_ptr.vmem [resolvable:$true] %s173
      %176 = dma.vmem_to_hbm [thread:$0]  %s174, 32, %s3, [#allocation4]
    $region25: #{tpu_custom_call.1} parent=1 // pred_fallthru
      _
    // Predicated region
    $region26: #{tpu_custom_call.1} parent=1 // pred_check
      _
    $region27: #{tpu_custom_call.1} parent=1 // pred_check_branch
      %178 = sbr.rel (0) target = $region29
    $region28: #{tpu_custom_call.1} parent=1 // pred_region
      %179 = dma.done [#allocation4], 32
    $region29: #{tpu_custom_call.1} parent=1 // pred_fallthru
      _
    %180 = vsyncpa [#allocation3], 1
    %181 = vsyncpa [#allocation6], 1
    %182 = vsyncpa [#allocation4], 1

</llo_original>
